<compile_context>
chip_gen: v7x
topology: tpu7x:2x2x1
jax: 0.10.0
libtpu: 0.0.40
codegen_flags: <defaults>
</compile_context>

<pallas_src>
import functools
import math

import jax
import jax.numpy as jnp
from jax.experimental import pallas as pl
from jax.experimental.pallas import tpu as pltpu


def _layernorm_kernel(x_ref, w_ref, b_ref, o_ref, *, eps, inv_hidden):
    # x_ref: (block_rows, hidden) tile in VMEM; stats computed in f32.
    xf = x_ref[...].astype(jnp.float32)
    mean = jnp.sum(xf, axis=-1, keepdims=True) * inv_hidden
    # Two-pass variance (strict torch.nn.LayerNorm numerics). (xf - mean) is
    # deliberately NOT bound to a reused variable: it is recomputed in the
    # output expression so the compiler may keep only one full-tile f32
    # temporary live at a time instead of two.
    var = jnp.sum((xf - mean) * (xf - mean), axis=-1, keepdims=True) * inv_hidden
    inv = jax.lax.rsqrt(var + eps)
    # w_ref/b_ref are (1, hidden) f32; implicit broadcast over rows.
    o_ref[...] = ((xf - mean) * inv * w_ref[...] + b_ref[...]).astype(o_ref.dtype)


def _round_up(x, m):
    return ((x + m - 1) // m) * m


def _tpu_generation():
    """Best-effort TPU generation sniffing. Returns (is_v7x, is_v5)."""
    try:
        kind = jax.devices()[0].device_kind.lower()
    except Exception:  # pragma: no cover - defensive; fall back to v6e-ish defaults
        kind = ""
    is_v7 = ("7" in kind)
    is_v5 = ("v5" in kind) or ("5 lite" in kind)
    return is_v7, is_v5


def _choose_block_rows(rows, hidden, itemsize, *, target_f32_bytes, min_blocks):
    """Pick a row-tile size.

    The target is expressed in f32 bytes because the kernel upcasts the whole
    tile to f32; for bf16/int8 inputs this automatically shrinks the DMA'd
    tile so the f32 working set stays within budget.
    """
    # Sublane multiple: 8 for 32-bit, 16 for 16-bit, 32 for 8-bit dtypes.
    mult = max(8, 32 // max(1, itemsize))
    if rows <= mult:
        # Full-extent block along rows satisfies the (8,128) tiling rule.
        return rows
    row_f32_bytes = hidden * 4
    br = max(mult, (target_f32_bytes // max(1, row_f32_bytes)) // mult * mult)
    # Only shrink tiles to get multiple grid steps when it actually buys
    # something (v7x megacore: shard the "parallel" axis across the 2 TCs).
    if min_blocks > 1 and rows >= min_blocks * mult:
        br = min(br, max(mult, _round_up(pl.cdiv(rows, min_blocks), mult)))
    # Never exceed the (rounded-up) number of rows; ragged last block's
    # stores are masked by Pallas (rows are independent, so the garbage rows
    # read in the last tile never leak).
    br = min(br, _round_up(rows, mult))
    return br


def layer_norm(x, weight, bias, eps=1e-5, *, block_rows=None):
    """LayerNorm over the last dim of x (matches torch.nn.LayerNorm with
    elementwise affine). weight/bias have shape (hidden,)."""
    orig_shape = x.shape
    hidden = orig_shape[-1]
    assert weight.shape == (hidden,) and bias.shape == (hidden,)

    rows = math.prod(orig_shape[:-1]) if len(orig_shape) > 1 else 1
    x2d = x.reshape(rows, hidden)

    itemsize = jnp.dtype(x.dtype).itemsize
    is_v7x, is_v5 = _tpu_generation()

    if is_v7x:
        # v7x: ~3.2 TB/s HBM per TC -> larger tiles amortize per-step overhead;
        # 2 TCs -> want >= 4 blocks (even count) so the parallel axis shards.
        target_f32_bytes = 8 * 1024 * 1024
        min_blocks = 4
        vmem_cap = 48 * 1024 * 1024  # leave headroom below the 64 MiB physical VMEM
    else:
        # v5e / v6e: single TC, grid is a serial loop -> don't shrink tiles to
        # manufacture steps; ~4 MiB f32 working set already puts per-step
        # overhead well under 5% at their HBM bandwidths.
        target_f32_bytes = 4 * 1024 * 1024
        min_blocks = 1
        vmem_cap = 64 * 1024 * 1024

    if block_rows is None:
        block_rows = _choose_block_rows(
            rows, hidden, itemsize,
            target_f32_bytes=target_f32_bytes, min_blocks=min_blocks)

    # Tiny parameter arrays: cast once here (not per grid step in the kernel),
    # shaped (1, hidden) for lane-aligned broadcast.
    w2d = weight.astype(jnp.float32).reshape(1, hidden)
    b2d = bias.astype(jnp.float32).reshape(1, hidden)

    # No padded copy of x and no output slice: Pallas masks the ragged last
    # block's stores, and the output allocation is exactly (rows, hidden).
    grid = (pl.cdiv(rows, block_rows),)

    # VMEM budget: double-buffered input + output tiles (native dtype) plus the
    # f32 upcast working set (~2 full tiles live inside the body), params, and
    # headroom — capped per-generation.
    tile_native_bytes = block_rows * hidden * itemsize
    tile_f32_bytes = block_rows * hidden * 4
    param_bytes = 2 * 2 * hidden * 4
    footprint = (2 * 2 * tile_native_bytes        # in + out, double-buffered
                 + 2 * tile_f32_bytes             # f32 intermediates
                 + param_bytes
                 + 4 * 1024 * 1024)               # headroom / internal scratch
    vmem_limit = min(vmem_cap, max(16 * 1024 * 1024, footprint))

    out = pl.pallas_call(
        functools.partial(_layernorm_kernel, eps=float(eps), inv_hidden=1.0 / hidden),
        out_shape=jax.ShapeDtypeStruct((rows, hidden), x.dtype),
        grid_spec=pltpu.PrefetchScalarGridSpec(
            num_scalar_prefetch=0,
            grid=grid,
            in_specs=[
                pl.BlockSpec((block_rows, hidden), lambda i: (i, 0)),
                pl.BlockSpec((1, hidden), lambda i: (0, 0)),
                pl.BlockSpec((1, hidden), lambda i: (0, 0)),
            ],
            out_specs=pl.BlockSpec((block_rows, hidden), lambda i: (i, 0)),
        ),
        compiler_params=pltpu.CompilerParams(
            dimension_semantics=("parallel",),
            vmem_limit_bytes=int(vmem_limit),
        ),
    )(x2d, w2d, b2d)

    return out.reshape(orig_shape)


if __name__ == "__main__":
    key = jax.random.PRNGKey(0)
    kx, kw, kb = jax.random.split(key, 3)

    batch, seq, hidden = 2, 8, 32
    x = jax.random.normal(kx, (batch, seq, hidden), dtype=jnp.float32)
    # Deterministic parameter init (the module's reset_parameters is a no-op).
    weight = jax.random.normal(kw, (hidden,), dtype=jnp.float32)
    bias = jax.random.normal(kb, (hidden,), dtype=jnp.float32)

    out = layer_norm(x, weight, bias, eps=1e-5)
    jax.block_until_ready(out)

    # Reference check against pure-JAX layernorm.
    mean = jnp.mean(x, axis=-1, keepdims=True)
    var = jnp.mean((x - mean) ** 2, axis=-1, keepdims=True)
    ref = (x - mean) * jax.lax.rsqrt(var + 1e-5) * weight + bias
    assert jnp.allclose(out, ref, atol=1e-5, rtol=1e-5), "mismatch vs reference"

    print("KERNEL_OK")
</pallas_src>

<mosaic_0001>
module attributes {stable_mosaic.version = 11 : i64} {
  func.func @_layernorm_kernel(%arg0: i32, %arg1: memref<16x32xf32, #tpu.memory_space<vmem>>, %arg2: memref<1x32xf32, #tpu.memory_space<vmem>>, %arg3: memref<1x32xf32, #tpu.memory_space<vmem>>, %arg4: memref<16x32xf32, #tpu.memory_space<vmem>>) attributes {dimension_semantics = [#tpu.dimension_semantics<parallel>], iteration_bounds = array<i64: 1>, scalar_prefetch = 0 : i64, scratch_operands = 0 : i64, tpu.core_type = #tpu.core_type<tc>, window_params = [{transform_indices = @transform_0, window_bounds = array<i64: 16, 32>}, {pipeline_mode = #tpu.pipeline_mode<synchronous>, transform_indices = @transform_1, window_bounds = array<i64: 1, 32>}, {pipeline_mode = #tpu.pipeline_mode<synchronous>, transform_indices = @transform_2, window_bounds = array<i64: 1, 32>}, {transform_indices = @transform_3, window_bounds = array<i64: 16, 32>}]} {
    %c0 = arith.constant 0 : index
    %c0_0 = arith.constant 0 : index
    %0 = vector.load %arg1[%c0, %c0_0] : memref<16x32xf32, #tpu.memory_space<vmem>>, vector<16x32xf32>
    %cst = arith.constant dense<0.000000e+00> : vector<16xf32>
    %1 = vector.multi_reduction <add>, %0, %cst [1] : vector<16x32xf32> to vector<16xf32>
    %2 = vector.shape_cast %1 : vector<16xf32> to vector<16x1xf32>
    %cst_1 = arith.constant 3.125000e-02 : f32
    %3 = vector.broadcast %cst_1 : f32 to vector<16x1xf32>
    %4 = arith.mulf %2, %3 : vector<16x1xf32>
    %5 = vector.broadcast %4 : vector<16x1xf32> to vector<16x32xf32>
    %6 = arith.subf %0, %5 : vector<16x32xf32>
    %7 = vector.broadcast %4 : vector<16x1xf32> to vector<16x32xf32>
    %8 = arith.subf %0, %7 : vector<16x32xf32>
    %9 = arith.mulf %6, %8 : vector<16x32xf32>
    %cst_2 = arith.constant dense<0.000000e+00> : vector<16xf32>
    %10 = vector.multi_reduction <add>, %9, %cst_2 [1] : vector<16x32xf32> to vector<16xf32>
    %11 = vector.shape_cast %10 : vector<16xf32> to vector<16x1xf32>
    %cst_3 = arith.constant 3.125000e-02 : f32
    %12 = vector.broadcast %cst_3 : f32 to vector<16x1xf32>
    %13 = arith.mulf %11, %12 : vector<16x1xf32>
    %cst_4 = arith.constant 9.99999974E-6 : f32
    %14 = vector.broadcast %cst_4 : f32 to vector<16x1xf32>
    %15 = arith.addf %13, %14 : vector<16x1xf32>
    %16 = math.rsqrt %15 : vector<16x1xf32>
    %17 = vector.broadcast %4 : vector<16x1xf32> to vector<16x32xf32>
    %18 = arith.subf %0, %17 : vector<16x32xf32>
    %19 = vector.broadcast %16 : vector<16x1xf32> to vector<16x32xf32>
    %20 = arith.mulf %18, %19 : vector<16x32xf32>
    %c0_5 = arith.constant 0 : index
    %c0_6 = arith.constant 0 : index
    %21 = vector.load %arg2[%c0_5, %c0_6] : memref<1x32xf32, #tpu.memory_space<vmem>>, vector<1x32xf32>
    %22 = vector.broadcast %21 : vector<1x32xf32> to vector<16x32xf32>
    %23 = arith.mulf %20, %22 : vector<16x32xf32>
    %c0_7 = arith.constant 0 : index
    %c0_8 = arith.constant 0 : index
    %24 = vector.load %arg3[%c0_7, %c0_8] : memref<1x32xf32, #tpu.memory_space<vmem>>, vector<1x32xf32>
    %25 = vector.broadcast %24 : vector<1x32xf32> to vector<16x32xf32>
    %26 = arith.addf %23, %25 : vector<16x32xf32>
    %c0_9 = arith.constant 0 : index
    %c0_10 = arith.constant 0 : index
    %27 = vector.load %arg4[%c0_9, %c0_10] : memref<16x32xf32, #tpu.memory_space<vmem>>, vector<16x32xf32>
    tpu.vector_store %arg4[%c0_9, %c0_10], %26 {strides = array<i32>} : memref<16x32xf32, #tpu.memory_space<vmem>>, vector<16x32xf32>,
    return
  }
  func.func @transform_0(%arg0: i32) -> (i32, i32) {
    %c0_i32 = arith.constant 0 : i32
    %c0_i32_0 = arith.constant 0 : i32
    return %arg0, %c0_i32 : i32, i32
  }
  func.func @transform_1(%arg0: i32) -> (i32, i32) {
    %c0_i32 = arith.constant 0 : i32
    %c0_i32_0 = arith.constant 0 : i32
    %c0_i32_1 = arith.constant 0 : i32
    return %c0_i32, %c0_i32_0 : i32, i32
  }
  func.func @transform_2(%arg0: i32) -> (i32, i32) {
    %c0_i32 = arith.constant 0 : i32
    %c0_i32_0 = arith.constant 0 : i32
    %c0_i32_1 = arith.constant 0 : i32
    return %c0_i32, %c0_i32_0 : i32, i32
  }
  func.func @transform_3(%arg0: i32) -> (i32, i32) {
    %c0_i32 = arith.constant 0 : i32
    %c0_i32_0 = arith.constant 0 : i32
    return %arg0, %c0_i32 : i32, i32
  }
}

</mosaic_0001>

<llo_original>
// kernel: tpu_custom_call.1
$region0: #{tpu_custom_call.1}
  #allocation0 [shape = 'u32[]', space=smem, size = 0x4, offset = 0x4, fixed_abs, tag = 'smem constant byte address 0x4 - core index']
  #allocation1 [shape = 'u32[144,128]{1,0:T(1,128)}', space=vmem, size = 0x12000, scoped, tag = 'internal scratch']
  %s0 = inlined_call_operand.hbm [shape: f32[16,32], index: 0, kind: input, shape index: {}]
  %s1 = inlined_call_operand.vmem [shape: f32[1,32], index: 1, kind: input, shape index: {}]
  %s2 = inlined_call_operand.vmem [shape: f32[1,32], index: 2, kind: input, shape index: {}]
  %s3 = inlined_call_operand.hbm [shape: f32[16,32], index: 3, kind: output, shape index: {}]
  %s4 = sld [smem:[#allocation0]]
  $region26: #{tpu_custom_call.1} parent=0
    _
  %s6 = ssub.s32 1, %s4
  %s7 = scalar_select 0, %s6, %s4
  $region1: #{tpu_custom_call.1} parent=0
    #allocation2 [shape = 'u8[8192]{0}', space=vmem, size = 0x2000, scoped, tag = 'input window, operand 0, single buffered']
    #allocation3 [shape = 's32[1]{0}', space=sflag, size = 0x4, scoped, tag = 'scoped memory for tpu_custom_call.1']
    #allocation4 [shape = 's32[1]{0}', space=sflag, size = 0x4, scoped, tag = 'scoped memory for tpu_custom_call.1']
    #allocation5 [shape = 'u8[8192]{0}', space=vmem, size = 0x2000, scoped, tag = 'output window, operand 0, single buffered']
    %8 = vsyncpa [#allocation3], 0
    %9 = vsyncpa [#allocation4], 0
    // Predicated region
    $region2: #{tpu_custom_call.1} parent=1 // pred_check
      _
    $region3: #{tpu_custom_call.1} parent=1 // pred_check_branch
      %11 = sbr.rel (0) target = $region5
    $region4: #{tpu_custom_call.1} parent=1 // pred_region
      %s13 = ssub.s32 256, 256
      %14 = vsyncadd [#allocation3], %s13
      %s15 = sshll.u32 [#allocation2], 4
      %s16 = int_to_ptr.vmem [resolvable:$true] %s15
      %21 = dma.hbm_to_vmem [thread:$0]  %s0, 256, %s16, [#allocation3], 128, 128, 8
    $region5: #{tpu_custom_call.1} parent=1 // pred_fallthru
      _
    // Predicated region
    $region6: #{tpu_custom_call.1} parent=1 // pred_check
      _
    $region7: #{tpu_custom_call.1} parent=1 // pred_check_branch
      %23 = sbr.rel (0) target = $region9
    $region8: #{tpu_custom_call.1} parent=1 // pred_region
      _
    $region9: #{tpu_custom_call.1} parent=1 // pred_fallthru
      _
    // Predicated region
    $region10: #{tpu_custom_call.1} parent=1 // pred_check
      _
    $region11: #{tpu_custom_call.1} parent=1 // pred_check_branch
      %25 = sbr.rel (0) target = $region13
    $region12: #{tpu_custom_call.1} parent=1 // pred_region
      _
    $region13: #{tpu_custom_call.1} parent=1 // pred_fallthru
      _
    // Predicated region
    $region14: #{tpu_custom_call.1} parent=1 // pred_check
      _
    $region15: #{tpu_custom_call.1} parent=1 // pred_check_branch
      %27 = sbr.rel (0) target = $region17
    $region16: #{tpu_custom_call.1} parent=1 // pred_region
      %28 = dma.done [#allocation3], 256
    $region17: #{tpu_custom_call.1} parent=1 // pred_fallthru
      _
    %v29 = vld [vmem:[#allocation2] sm:$0xff]
    %v30 = vld [vmem:[#allocation2 + $0x8] sm:$0xff]
    %vm31 = vcmask 261120
    %v32 = vsel %vm31, %v29, 0.0
    %33 = vadd.xlane.f32.xlu0 %v32
    %v34 = vpop.xlane.xlu0 %33
    %v35 = vsel %vm31, %v30, 0.0
    %36 = vadd.xlane.f32.xlu0 %v35
    %v37 = vpop.xlane.xlu0 %36
    %v38 = vmul.f32 %v34, 0.03125
    %v39 = vmul.f32 %v37, 0.03125
    %v40 = vsub.f32 %v29, %v38
    %v41 = vsub.f32 %v30, %v39
    %v42 = vmul.f32 %v40, %v40
    %v43 = vmul.f32 %v41, %v41
    %v44 = vsel %vm31, %v42, 0.0
    %45 = vadd.xlane.f32.xlu0 %v44
    %v46 = vpop.xlane.xlu0 %45
    %v47 = vsel %vm31, %v43, 0.0
    %48 = vadd.xlane.f32.xlu0 %v47
    %v49 = vpop.xlane.xlu0 %48
    %v50 = vmul.f32 %v46, 0.03125
    %v51 = vmul.f32 %v49, 0.03125
    %v52 = vadd.f32 %v50, 1e-05
    %v53 = vadd.f32 %v51, 1e-05
    %v54 = vrsqrt.pop %v52
    %v55 = vrsqrt.pop %v53
    %v56 = vmul.f32 %v40, %v54
    %v57 = vmul.f32 %v41, %v55
    %v58 = vld [vmem:[%s1] sm:$0x1]
    %v60 = vlaneseq
    %v61 = vshrl.u32 %v60, 7
    %v62 = vsub.s32 0, %v61
    %v63 = vrot.slane %v58, %v62
    %v65 = vmul.f32 %v56, %v63
    %v66 = vmul.f32 %v57, %v63
    %v67 = vld [vmem:[%s2] sm:$0x1]
    %v69 = vlaneseq
    %v70 = vshrl.u32 %v69, 7
    %v71 = vsub.s32 0, %v70
    %v72 = vrot.slane %v67, %v71
    %v74 = vadd.f32 %v65, %v72
    %v75 = vadd.f32 %v66, %v72
    %76 = vst.msk [vmem:[#allocation5] sm:$0xff] %vm31, %v74
    %77 = vst.msk [vmem:[#allocation5 + $0x8] sm:$0xff] %vm31, %v75
    // Predicated region
    $region18: #{tpu_custom_call.1} parent=1 // pred_check
      _
    $region19: #{tpu_custom_call.1} parent=1 // pred_check_branch
      %79 = sbr.rel (0) target = $region21
    $region20: #{tpu_custom_call.1} parent=1 // pred_region
      %s81 = ssub.s32 256, 256
      %82 = vsyncadd [#allocation4], %s81
      %s83 = sshll.u32 [#allocation5], 4
      %s84 = int_to_ptr.vmem [resolvable:$true] %s83
      %89 = dma.vmem_to_hbm [thread:$0]  %s84, 256, %s3, [#allocation4], 128, 128, 8
    $region21: #{tpu_custom_call.1} parent=1 // pred_fallthru
      _
    // Predicated region
    $region22: #{tpu_custom_call.1} parent=1 // pred_check
      _
    $region23: #{tpu_custom_call.1} parent=1 // pred_check_branch
      %91 = sbr.rel (0) target = $region25
    $region24: #{tpu_custom_call.1} parent=1 // pred_region
      %92 = dma.done [#allocation4], 256
    $region25: #{tpu_custom_call.1} parent=1 // pred_fallthru
      _
    %93 = vsyncpa [#allocation3], 1
    %94 = vsyncpa [#allocation4], 1

</llo_original>
